<compile_context>
chip_gen: v6e
topology: v6e:2x2x1
jax: 0.10.0
libtpu: 0.0.40
codegen_flags: <defaults>
</compile_context>

<pallas_src>
import functools

import jax
import jax.numpy as jnp
import numpy as np
from jax.experimental import pallas as pl
from jax.experimental.pallas import tpu as pltpu


# ----------------------------------------------------------------------------
# Analytic HSV channel maps (OpenCV float-path formulas + module's /179,/255).
# TODO(synk): cv2's 8-bit (uint8) HSV quantisation path is not reproducible on
# TPU; the analytic float-path conversion is used instead.
# ----------------------------------------------------------------------------
def _hsv_shared(r, g, b):
    v = jnp.maximum(jnp.maximum(r, g), b)
    mn = jnp.minimum(jnp.minimum(r, g), b)
    delta = v - mn
    return r, g, b, v, delta


def _chan_h(r, g, b, v, delta):
    safe = jnp.where(delta > 0.0, delta, 1.0)
    h = jnp.where(v == r, (g - b) / safe,
                  jnp.where(v == g, 2.0 + (b - r) / safe,
                            4.0 + (r - g) / safe))
    h = h * 60.0
    h = jnp.where(h < 0.0, h + 360.0, h)
    h = jnp.where(delta > 0.0, h, 0.0)
    return h * (1.0 / 179.0)


def _chan_s(r, g, b, v, delta):
    s = jnp.where(v > 0.0, delta / jnp.where(v > 0.0, v, 1.0), 0.0)
    return s * (1.0 / 255.0)


def _chan_v(r, g, b, v, delta):
    return v * (1.0 / 255.0)


# ----------------------------------------------------------------------------
# Kernel: one batch element per grid step.
# ----------------------------------------------------------------------------
def _channel_loss_kernel(inp_ref, tgt_ref, out_ref, *, H, W, pad):
    """One batch element: sum over 3 channels of sum((box(a)-box(b))^2)."""
    Ha, Wa = inp_ref.shape[2], inp_ref.shape[3]

    # Banded ones matrices: box filter as two MXU matmuls, box = bh @ d @ bw.
    #   bh[i, k] = 1  iff  i < H  and |i - k| <= pad   (vertical window)
    #   bw[l, j] = 1  iff  j < W  and |l - j| <= pad   (horizontal window)
    # Conv zero-padding and the alignment padding are handled by the band
    # structure (outputs outside [0,H)x[0,W) are exactly zero).
    ri = jax.lax.broadcasted_iota(jnp.int32, (Ha, Ha), 0)
    ci = jax.lax.broadcasted_iota(jnp.int32, (Ha, Ha), 1)
    bh = jnp.where((jnp.abs(ri - ci) <= pad) & (ri < H), 1.0, 0.0)

    rj = jax.lax.broadcasted_iota(jnp.int32, (Wa, Wa), 0)
    cj = jax.lax.broadcasted_iota(jnp.int32, (Wa, Wa), 1)
    bw = jnp.where((jnp.abs(rj - cj) <= pad) & (cj < W), 1.0, 0.0)

    # Validity mask for the bottom/right alignment padding (those RGB entries
    # are zero in both images, so the channel difference is already zero
    # there; the mask just makes that explicit / robust).
    rr = jax.lax.broadcasted_iota(jnp.int32, (Ha, Wa), 0)
    cc = jax.lax.broadcasted_iota(jnp.int32, (Ha, Wa), 1)
    valid = jnp.where((rr < H) & (cc < W), 1.0, 0.0)

    # Shared HSV intermediates, computed once per image (reused by H, S, V).
    sh_i = _hsv_shared(inp_ref[0, 0], inp_ref[0, 1], inp_ref[0, 2])
    sh_t = _hsv_shared(tgt_ref[0, 0], tgt_ref[0, 1], tgt_ref[0, 2])

    sq_acc = jnp.zeros((Ha, Wa), jnp.float32)
    for chan_fn in (_chan_h, _chan_s, _chan_v):
        # Linearity: box(a) - box(b) == box(a - b); filter the difference once.
        d = (chan_fn(*sh_i) - chan_fn(*sh_t)) * valid
        box = jnp.dot(bh,
                      jnp.dot(d, bw, preferred_element_type=jnp.float32),
                      preferred_element_type=jnp.float32)
        sq_acc = sq_acc + box * box

    # Single cross-lane reduction per grid step; write the scalar into lane
    # (0, 0) of this batch element's lane-dense (8, 128) output tile.
    total = jnp.sum(sq_acc)
    orow = jax.lax.broadcasted_iota(jnp.int32, (8, 128), 0)
    ocol = jax.lax.broadcasted_iota(jnp.int32, (8, 128), 1)
    out_ref[0] = jnp.where((orow == 0) & (ocol == 0), total, 0.0)


def _round_up(x, m):
    return (x + m - 1) // m * m


@functools.partial(jax.jit, static_argnames=("patch_size",))
def hsv_channel_loss(inp, tgt, patch_size=15):
    """Pallas implementation of the HSV channel-loss forward (scalar)."""
    N, C, H, W = inp.shape
    assert C == 3, "expected RGB input (N, 3, H, W)"
    assert patch_size % 2 == 1, "patch_size must be odd"
    pad = patch_size // 2

    # Sublane/lane-aligned spatial dims (zero pad bottom/right only — no
    # conv-padding round trip through HBM; the band matrices handle the
    # convolution's zero padding analytically).
    Ha = _round_up(H, 8)
    Wa = _round_up(W, 128)

    inp_a = inp.astype(jnp.float32)
    tgt_a = tgt.astype(jnp.float32)
    if (Ha, Wa) != (H, W):
        spad = ((0, 0), (0, 0), (0, Ha - H), (0, Wa - W))
        inp_a = jnp.pad(inp_a, spad)
        tgt_a = jnp.pad(tgt_a, spad)

    # VMEM budget: 2 inputs x double-buffer x (3, Ha, Wa) f32 blocks plus the
    # live intermediate maps and the two band matrices.  Raise the scoped
    # limit only when the default would be exceeded; cap below v7x's 64 MiB.
    est = ((2 * 2 * 3 + 14) * Ha * Wa * 4
           + (Ha * Ha + Wa * Wa) * 4
           + (2 << 20))
    vmem_limit = int(min(est, 64 << 20)) if est > (12 << 20) else None
    # TODO(synk): for very large images (est near/above 64 MiB) tile spatially
    # over rows with a (patch_size - 1) halo instead of whole-image blocks.

    kernel = functools.partial(_channel_loss_kernel, H=H, W=W, pad=pad)
    per_image = pl.pallas_call(
        kernel,
        out_shape=jax.ShapeDtypeStruct((N, 8, 128), jnp.float32),
        grid=(N,),
        in_specs=[
            pl.BlockSpec((1, 3, Ha, Wa), lambda n: (n, 0, 0, 0)),
            pl.BlockSpec((1, 3, Ha, Wa), lambda n: (n, 0, 0, 0)),
        ],
        out_specs=pl.BlockSpec((1, 8, 128), lambda n: (n, 0, 0)),
        compiler_params=pltpu.CompilerParams(
            dimension_semantics=("parallel",),
            vmem_limit_bytes=vmem_limit,
        ),
    )(inp_a, tgt_a)

    # Per-channel F.mse_loss(reduction='mean') over (N, 1, H, W), summed over
    # the three channels == (sum of all squared diffs) / (N * H * W).
    return jnp.sum(per_image[:, 0, 0]) / jnp.float32(N * H * W)


# ----------------------------------------------------------------------------
# Pure-JAX mirror of the PyTorch module (for the in-script correctness check).
# ----------------------------------------------------------------------------
def _reference_loss(inp, tgt, patch_size):
    pad = patch_size // 2

    def maps(img):
        r, g, b = img[:, 0], img[:, 1], img[:, 2]
        v = jnp.maximum(jnp.maximum(r, g), b)
        mn = jnp.minimum(jnp.minimum(r, g), b)
        delta = v - mn
        safe = jnp.where(delta > 0.0, delta, 1.0)
        h = jnp.where(v == r, (g - b) / safe,
                      jnp.where(v == g, 2.0 + (b - r) / safe,
                                4.0 + (r - g) / safe)) * 60.0
        h = jnp.where(h < 0.0, h + 360.0, h)
        h = jnp.where(delta > 0.0, h, 0.0)
        s = jnp.where(v > 0.0, delta / jnp.where(v > 0.0, v, 1.0), 0.0)
        return h / 179.0, s / 255.0, v / 255.0

    def box(m):
        return jax.lax.reduce_window(
            m, 0.0, jax.lax.add,
            window_dimensions=(1, patch_size, patch_size),
            window_strides=(1, 1, 1),
            padding=((0, 0), (pad, pad), (pad, pad)))

    ai = maps(inp.astype(jnp.float32))
    at = maps(tgt.astype(jnp.float32))
    loss = jnp.float32(0.0)
    for a, b in zip(ai, at):
        loss = loss + jnp.mean((box(a) - box(b)) ** 2)
    return loss


if __name__ == "__main__":
    key = jax.random.PRNGKey(0)
    k1, k2 = jax.random.split(key)
    N, C, H, W = 2, 3, 16, 16
    patch_size = 15

    inp = jax.random.uniform(k1, (N, C, H, W), dtype=jnp.float32)
    tgt = jax.random.uniform(k2, (N, C, H, W), dtype=jnp.float32)

    loss = jax.block_until_ready(hsv_channel_loss(inp, tgt, patch_size))
    ref = jax.block_until_ready(_reference_loss(inp, tgt, patch_size))

    # Slightly looser than bit-exact: the kernel filters the difference once
    # (linearity) and sums windows on the MXU, so the f32 summation order
    # differs from the reduce_window reference.
    np.testing.assert_allclose(np.asarray(loss), np.asarray(ref),
                               rtol=2e-3, atol=1e-2)
    print("KERNEL_OK")
</pallas_src>

<mosaic_0001>
module attributes {stable_mosaic.version = 11 : i64} {
  func.func @_channel_loss_kernel(%arg0: i32, %arg1: memref<1x3x16x128xf32, #tpu.memory_space<vmem>>, %arg2: memref<1x3x16x128xf32, #tpu.memory_space<vmem>>, %arg3: memref<1x8x128xf32, #tpu.memory_space<vmem>>) attributes {dimension_semantics = [#tpu.dimension_semantics<parallel>], iteration_bounds = array<i64: 2>, scalar_prefetch = 0 : i64, scratch_operands = 0 : i64, tpu.core_type = #tpu.core_type<tc>, window_params = [{transform_indices = @transform_0, window_bounds = array<i64: 1, 3, 16, 128>}, {transform_indices = @transform_1, window_bounds = array<i64: 1, 3, 16, 128>}, {transform_indices = @transform_2, window_bounds = array<i64: 1, 8, 128>}]} {
    %0 = tpu.iota {dimensions = array<i32: 0>} : vector<16x16xi32>
    %1 = tpu.iota {dimensions = array<i32: 1>} : vector<16x16xi32>
    %2 = arith.subi %0, %1 : vector<16x16xi32>
    %3 = math.absi %2 : vector<16x16xi32>
    %c7_i32 = arith.constant 7 : i32
    %4 = vector.broadcast %c7_i32 : i32 to vector<16x16xi32>
    %5 = arith.cmpi sle, %3, %4 : vector<16x16xi32>
    %c16_i32 = arith.constant 16 : i32
    %6 = vector.broadcast %c16_i32 : i32 to vector<16x16xi32>
    %7 = arith.cmpi slt, %0, %6 : vector<16x16xi32>
    %8 = arith.andi %5, %7 : vector<16x16xi1>
    %cst = arith.constant 1.000000e+00 : f32
    %cst_0 = arith.constant 0.000000e+00 : f32
    %9 = vector.broadcast %cst : f32 to vector<16x16xf32>
    %10 = vector.broadcast %cst_0 : f32 to vector<16x16xf32>
    %11 = arith.select %8, %9, %10 : vector<16x16xi1>, vector<16x16xf32>
    %12 = tpu.iota {dimensions = array<i32: 0>} : vector<128x128xi32>
    %13 = tpu.iota {dimensions = array<i32: 1>} : vector<128x128xi32>
    %14 = arith.subi %12, %13 : vector<128x128xi32>
    %15 = math.absi %14 : vector<128x128xi32>
    %c7_i32_1 = arith.constant 7 : i32
    %16 = vector.broadcast %c7_i32_1 : i32 to vector<128x128xi32>
    %17 = arith.cmpi sle, %15, %16 : vector<128x128xi32>
    %c16_i32_2 = arith.constant 16 : i32
    %18 = vector.broadcast %c16_i32_2 : i32 to vector<128x128xi32>
    %19 = arith.cmpi slt, %13, %18 : vector<128x128xi32>
    %20 = arith.andi %17, %19 : vector<128x128xi1>
    %cst_3 = arith.constant 1.000000e+00 : f32
    %cst_4 = arith.constant 0.000000e+00 : f32
    %21 = vector.broadcast %cst_3 : f32 to vector<128x128xf32>
    %22 = vector.broadcast %cst_4 : f32 to vector<128x128xf32>
    %23 = arith.select %20, %21, %22 : vector<128x128xi1>, vector<128x128xf32>
    %24 = tpu.iota {dimensions = array<i32: 0>} : vector<16x128xi32>
    %25 = tpu.iota {dimensions = array<i32: 1>} : vector<16x128xi32>
    %c16_i32_5 = arith.constant 16 : i32
    %26 = vector.broadcast %c16_i32_5 : i32 to vector<16x128xi32>
    %27 = arith.cmpi slt, %24, %26 : vector<16x128xi32>
    %c16_i32_6 = arith.constant 16 : i32
    %28 = vector.broadcast %c16_i32_6 : i32 to vector<16x128xi32>
    %29 = arith.cmpi slt, %25, %28 : vector<16x128xi32>
    %30 = arith.andi %27, %29 : vector<16x128xi1>
    %cst_7 = arith.constant 1.000000e+00 : f32
    %cst_8 = arith.constant 0.000000e+00 : f32
    %31 = vector.broadcast %cst_7 : f32 to vector<16x128xf32>
    %32 = vector.broadcast %cst_8 : f32 to vector<16x128xf32>
    %33 = arith.select %30, %31, %32 : vector<16x128xi1>, vector<16x128xf32>
    %c0 = arith.constant 0 : index
    %c0_9 = arith.constant 0 : index
    %c0_10 = arith.constant 0 : index
    %c0_11 = arith.constant 0 : index
    %34 = vector.load %arg1[%c0, %c0_9, %c0_10, %c0_11] : memref<1x3x16x128xf32, #tpu.memory_space<vmem>>, vector<1x1x16x128xf32>
    %35 = vector.shape_cast %34 : vector<1x1x16x128xf32> to vector<16x128xf32>
    %c0_12 = arith.constant 0 : index
    %c1 = arith.constant 1 : index
    %c0_13 = arith.constant 0 : index
    %c0_14 = arith.constant 0 : index
    %36 = vector.load %arg1[%c0_12, %c1, %c0_13, %c0_14] : memref<1x3x16x128xf32, #tpu.memory_space<vmem>>, vector<1x1x16x128xf32>
    %37 = vector.shape_cast %36 : vector<1x1x16x128xf32> to vector<16x128xf32>
    %c0_15 = arith.constant 0 : index
    %c2 = arith.constant 2 : index
    %c0_16 = arith.constant 0 : index
    %c0_17 = arith.constant 0 : index
    %38 = vector.load %arg1[%c0_15, %c2, %c0_16, %c0_17] : memref<1x3x16x128xf32, #tpu.memory_space<vmem>>, vector<1x1x16x128xf32>
    %39 = vector.shape_cast %38 : vector<1x1x16x128xf32> to vector<16x128xf32>
    %40 = arith.maximumf %35, %37 : vector<16x128xf32>
    %41 = arith.maximumf %40, %39 : vector<16x128xf32>
    %42 = arith.minimumf %35, %37 : vector<16x128xf32>
    %43 = arith.minimumf %42, %39 : vector<16x128xf32>
    %44 = arith.subf %41, %43 : vector<16x128xf32>
    %c0_18 = arith.constant 0 : index
    %c0_19 = arith.constant 0 : index
    %c0_20 = arith.constant 0 : index
    %c0_21 = arith.constant 0 : index
    %45 = vector.load %arg2[%c0_18, %c0_19, %c0_20, %c0_21] : memref<1x3x16x128xf32, #tpu.memory_space<vmem>>, vector<1x1x16x128xf32>
    %46 = vector.shape_cast %45 : vector<1x1x16x128xf32> to vector<16x128xf32>
    %c0_22 = arith.constant 0 : index
    %c1_23 = arith.constant 1 : index
    %c0_24 = arith.constant 0 : index
    %c0_25 = arith.constant 0 : index
    %47 = vector.load %arg2[%c0_22, %c1_23, %c0_24, %c0_25] : memref<1x3x16x128xf32, #tpu.memory_space<vmem>>, vector<1x1x16x128xf32>
    %48 = vector.shape_cast %47 : vector<1x1x16x128xf32> to vector<16x128xf32>
    %c0_26 = arith.constant 0 : index
    %c2_27 = arith.constant 2 : index
    %c0_28 = arith.constant 0 : index
    %c0_29 = arith.constant 0 : index
    %49 = vector.load %arg2[%c0_26, %c2_27, %c0_28, %c0_29] : memref<1x3x16x128xf32, #tpu.memory_space<vmem>>, vector<1x1x16x128xf32>
    %50 = vector.shape_cast %49 : vector<1x1x16x128xf32> to vector<16x128xf32>
    %51 = arith.maximumf %46, %48 : vector<16x128xf32>
    %52 = arith.maximumf %51, %50 : vector<16x128xf32>
    %53 = arith.minimumf %46, %48 : vector<16x128xf32>
    %54 = arith.minimumf %53, %50 : vector<16x128xf32>
    %55 = arith.subf %52, %54 : vector<16x128xf32>
    %cst_30 = arith.constant 0.000000e+00 : f32
    %56 = vector.broadcast %cst_30 : f32 to vector<16x128xf32>
    %cst_31 = arith.constant 0.000000e+00 : f32
    %57 = vector.broadcast %cst_31 : f32 to vector<16x128xf32>
    %58 = arith.cmpf ogt, %44, %57 : vector<16x128xf32>
    %cst_32 = arith.constant 1.000000e+00 : f32
    %59 = vector.broadcast %cst_32 : f32 to vector<16x128xf32>
    %60 = arith.select %58, %44, %59 : vector<16x128xi1>, vector<16x128xf32>
    %61 = arith.cmpf oeq, %41, %35 : vector<16x128xf32>
    %62 = arith.subf %37, %39 : vector<16x128xf32>
    %63 = arith.divf %62, %60 : vector<16x128xf32>
    %64 = arith.cmpf oeq, %41, %37 : vector<16x128xf32>
    %65 = arith.subf %39, %35 : vector<16x128xf32>
    %66 = arith.divf %65, %60 : vector<16x128xf32>
    %cst_33 = arith.constant 2.000000e+00 : f32
    %67 = vector.broadcast %cst_33 : f32 to vector<16x128xf32>
    %68 = arith.addf %67, %66 : vector<16x128xf32>
    %69 = arith.subf %35, %37 : vector<16x128xf32>
    %70 = arith.divf %69, %60 : vector<16x128xf32>
    %cst_34 = arith.constant 4.000000e+00 : f32
    %71 = vector.broadcast %cst_34 : f32 to vector<16x128xf32>
    %72 = arith.addf %71, %70 : vector<16x128xf32>
    %73 = arith.select %64, %68, %72 : vector<16x128xi1>, vector<16x128xf32>
    %74 = arith.select %61, %63, %73 : vector<16x128xi1>, vector<16x128xf32>
    %cst_35 = arith.constant 6.000000e+01 : f32
    %75 = vector.broadcast %cst_35 : f32 to vector<16x128xf32>
    %76 = arith.mulf %74, %75 : vector<16x128xf32>
    %cst_36 = arith.constant 0.000000e+00 : f32
    %77 = vector.broadcast %cst_36 : f32 to vector<16x128xf32>
    %78 = arith.cmpf olt, %76, %77 : vector<16x128xf32>
    %cst_37 = arith.constant 3.600000e+02 : f32
    %79 = vector.broadcast %cst_37 : f32 to vector<16x128xf32>
    %80 = arith.addf %76, %79 : vector<16x128xf32>
    %81 = arith.select %78, %80, %76 : vector<16x128xi1>, vector<16x128xf32>
    %cst_38 = arith.constant 0.000000e+00 : f32
    %82 = vector.broadcast %cst_38 : f32 to vector<16x128xf32>
    %83 = arith.cmpf ogt, %44, %82 : vector<16x128xf32>
    %cst_39 = arith.constant 0.000000e+00 : f32
    %84 = vector.broadcast %cst_39 : f32 to vector<16x128xf32>
    %85 = arith.select %83, %81, %84 : vector<16x128xi1>, vector<16x128xf32>
    %cst_40 = arith.constant 0.00558659201 : f32
    %86 = vector.broadcast %cst_40 : f32 to vector<16x128xf32>
    %87 = arith.mulf %85, %86 : vector<16x128xf32>
    %cst_41 = arith.constant 0.000000e+00 : f32
    %88 = vector.broadcast %cst_41 : f32 to vector<16x128xf32>
    %89 = arith.cmpf ogt, %55, %88 : vector<16x128xf32>
    %cst_42 = arith.constant 1.000000e+00 : f32
    %90 = vector.broadcast %cst_42 : f32 to vector<16x128xf32>
    %91 = arith.select %89, %55, %90 : vector<16x128xi1>, vector<16x128xf32>
    %92 = arith.cmpf oeq, %52, %46 : vector<16x128xf32>
    %93 = arith.subf %48, %50 : vector<16x128xf32>
    %94 = arith.divf %93, %91 : vector<16x128xf32>
    %95 = arith.cmpf oeq, %52, %48 : vector<16x128xf32>
    %96 = arith.subf %50, %46 : vector<16x128xf32>
    %97 = arith.divf %96, %91 : vector<16x128xf32>
    %cst_43 = arith.constant 2.000000e+00 : f32
    %98 = vector.broadcast %cst_43 : f32 to vector<16x128xf32>
    %99 = arith.addf %98, %97 : vector<16x128xf32>
    %100 = arith.subf %46, %48 : vector<16x128xf32>
    %101 = arith.divf %100, %91 : vector<16x128xf32>
    %cst_44 = arith.constant 4.000000e+00 : f32
    %102 = vector.broadcast %cst_44 : f32 to vector<16x128xf32>
    %103 = arith.addf %102, %101 : vector<16x128xf32>
    %104 = arith.select %95, %99, %103 : vector<16x128xi1>, vector<16x128xf32>
    %105 = arith.select %92, %94, %104 : vector<16x128xi1>, vector<16x128xf32>
    %cst_45 = arith.constant 6.000000e+01 : f32
    %106 = vector.broadcast %cst_45 : f32 to vector<16x128xf32>
    %107 = arith.mulf %105, %106 : vector<16x128xf32>
    %cst_46 = arith.constant 0.000000e+00 : f32
    %108 = vector.broadcast %cst_46 : f32 to vector<16x128xf32>
    %109 = arith.cmpf olt, %107, %108 : vector<16x128xf32>
    %cst_47 = arith.constant 3.600000e+02 : f32
    %110 = vector.broadcast %cst_47 : f32 to vector<16x128xf32>
    %111 = arith.addf %107, %110 : vector<16x128xf32>
    %112 = arith.select %109, %111, %107 : vector<16x128xi1>, vector<16x128xf32>
    %cst_48 = arith.constant 0.000000e+00 : f32
    %113 = vector.broadcast %cst_48 : f32 to vector<16x128xf32>
    %114 = arith.cmpf ogt, %55, %113 : vector<16x128xf32>
    %cst_49 = arith.constant 0.000000e+00 : f32
    %115 = vector.broadcast %cst_49 : f32 to vector<16x128xf32>
    %116 = arith.select %114, %112, %115 : vector<16x128xi1>, vector<16x128xf32>
    %cst_50 = arith.constant 0.00558659201 : f32
    %117 = vector.broadcast %cst_50 : f32 to vector<16x128xf32>
    %118 = arith.mulf %116, %117 : vector<16x128xf32>
    %119 = arith.subf %87, %118 : vector<16x128xf32>
    %120 = arith.mulf %119, %33 : vector<16x128xf32>
    %cst_51 = arith.constant dense<0.000000e+00> : vector<16x128xf32>
    %121 = tpu.matmul %120, %23, %cst_51 {dimension_numbers = #tpu.dot_dimension_numbers<[1], [0], [0], [1], [0, 0, 1, 1], [], []>} : vector<16x128xf32>, vector<128x128xf32>, vector<16x128xf32> -> vector<16x128xf32>
    %cst_52 = arith.constant dense<0.000000e+00> : vector<16x128xf32>
    %122 = tpu.matmul %11, %121, %cst_52 {dimension_numbers = #tpu.dot_dimension_numbers<[1], [0], [0], [1], [0, 0, 1, 1], [], []>} : vector<16x16xf32>, vector<16x128xf32>, vector<16x128xf32> -> vector<16x128xf32>
    %123 = arith.mulf %122, %122 : vector<16x128xf32>
    %124 = arith.addf %56, %123 : vector<16x128xf32>
    %cst_53 = arith.constant 0.000000e+00 : f32
    %125 = vector.broadcast %cst_53 : f32 to vector<16x128xf32>
    %126 = arith.cmpf ogt, %41, %125 : vector<16x128xf32>
    %cst_54 = arith.constant 0.000000e+00 : f32
    %127 = vector.broadcast %cst_54 : f32 to vector<16x128xf32>
    %128 = arith.cmpf ogt, %41, %127 : vector<16x128xf32>
    %cst_55 = arith.constant 1.000000e+00 : f32
    %129 = vector.broadcast %cst_55 : f32 to vector<16x128xf32>
    %130 = arith.select %128, %41, %129 : vector<16x128xi1>, vector<16x128xf32>
    %131 = arith.divf %44, %130 : vector<16x128xf32>
    %cst_56 = arith.constant 0.000000e+00 : f32
    %132 = vector.broadcast %cst_56 : f32 to vector<16x128xf32>
    %133 = arith.select %126, %131, %132 : vector<16x128xi1>, vector<16x128xf32>
    %cst_57 = arith.constant 0.00392156886 : f32
    %134 = vector.broadcast %cst_57 : f32 to vector<16x128xf32>
    %135 = arith.mulf %133, %134 : vector<16x128xf32>
    %cst_58 = arith.constant 0.000000e+00 : f32
    %136 = vector.broadcast %cst_58 : f32 to vector<16x128xf32>
    %137 = arith.cmpf ogt, %52, %136 : vector<16x128xf32>
    %cst_59 = arith.constant 0.000000e+00 : f32
    %138 = vector.broadcast %cst_59 : f32 to vector<16x128xf32>
    %139 = arith.cmpf ogt, %52, %138 : vector<16x128xf32>
    %cst_60 = arith.constant 1.000000e+00 : f32
    %140 = vector.broadcast %cst_60 : f32 to vector<16x128xf32>
    %141 = arith.select %139, %52, %140 : vector<16x128xi1>, vector<16x128xf32>
    %142 = arith.divf %55, %141 : vector<16x128xf32>
    %cst_61 = arith.constant 0.000000e+00 : f32
    %143 = vector.broadcast %cst_61 : f32 to vector<16x128xf32>
    %144 = arith.select %137, %142, %143 : vector<16x128xi1>, vector<16x128xf32>
    %cst_62 = arith.constant 0.00392156886 : f32
    %145 = vector.broadcast %cst_62 : f32 to vector<16x128xf32>
    %146 = arith.mulf %144, %145 : vector<16x128xf32>
    %147 = arith.subf %135, %146 : vector<16x128xf32>
    %148 = arith.mulf %147, %33 : vector<16x128xf32>
    %cst_63 = arith.constant dense<0.000000e+00> : vector<16x128xf32>
    %149 = tpu.matmul %148, %23, %cst_63 {dimension_numbers = #tpu.dot_dimension_numbers<[1], [0], [0], [1], [0, 0, 1, 1], [], []>} : vector<16x128xf32>, vector<128x128xf32>, vector<16x128xf32> -> vector<16x128xf32>
    %cst_64 = arith.constant dense<0.000000e+00> : vector<16x128xf32>
    %150 = tpu.matmul %11, %149, %cst_64 {dimension_numbers = #tpu.dot_dimension_numbers<[1], [0], [0], [1], [0, 0, 1, 1], [], []>} : vector<16x16xf32>, vector<16x128xf32>, vector<16x128xf32> -> vector<16x128xf32>
    %151 = arith.mulf %150, %150 : vector<16x128xf32>
    %152 = arith.addf %124, %151 : vector<16x128xf32>
    %cst_65 = arith.constant 0.00392156886 : f32
    %153 = vector.broadcast %cst_65 : f32 to vector<16x128xf32>
    %154 = arith.mulf %41, %153 : vector<16x128xf32>
    %cst_66 = arith.constant 0.00392156886 : f32
    %155 = vector.broadcast %cst_66 : f32 to vector<16x128xf32>
    %156 = arith.mulf %52, %155 : vector<16x128xf32>
    %157 = arith.subf %154, %156 : vector<16x128xf32>
    %158 = arith.mulf %157, %33 : vector<16x128xf32>
    %cst_67 = arith.constant dense<0.000000e+00> : vector<16x128xf32>
    %159 = tpu.matmul %158, %23, %cst_67 {dimension_numbers = #tpu.dot_dimension_numbers<[1], [0], [0], [1], [0, 0, 1, 1], [], []>} : vector<16x128xf32>, vector<128x128xf32>, vector<16x128xf32> -> vector<16x128xf32>
    %cst_68 = arith.constant dense<0.000000e+00> : vector<16x128xf32>
    %160 = tpu.matmul %11, %159, %cst_68 {dimension_numbers = #tpu.dot_dimension_numbers<[1], [0], [0], [1], [0, 0, 1, 1], [], []>} : vector<16x16xf32>, vector<16x128xf32>, vector<16x128xf32> -> vector<16x128xf32>
    %161 = arith.mulf %160, %160 : vector<16x128xf32>
    %162 = arith.addf %152, %161 : vector<16x128xf32>
    %163 = vector.shape_cast %162 : vector<16x128xf32> to vector<1x16x128xf32>
    %cst_69 = arith.constant dense<0.000000e+00> : vector<1xf32>
    %164 = vector.multi_reduction <add>, %163, %cst_69 [1, 2] : vector<1x16x128xf32> to vector<1xf32>
    %165 = vector.shape_cast %164 : vector<1xf32> to vector<1x1x1xf32>
    %166 = vector.extract %165[0, 0, 0] : f32 from vector<1x1x1xf32>
    %167 = tpu.iota {dimensions = array<i32: 0>} : vector<8x128xi32>
    %168 = tpu.iota {dimensions = array<i32: 1>} : vector<8x128xi32>
    %c0_i32 = arith.constant 0 : i32
    %169 = vector.broadcast %c0_i32 : i32 to vector<8x128xi32>
    %170 = arith.cmpi eq, %167, %169 : vector<8x128xi32>
    %c0_i32_70 = arith.constant 0 : i32
    %171 = vector.broadcast %c0_i32_70 : i32 to vector<8x128xi32>
    %172 = arith.cmpi eq, %168, %171 : vector<8x128xi32>
    %173 = arith.andi %170, %172 : vector<8x128xi1>
    %cst_71 = arith.constant 0.000000e+00 : f32
    %174 = vector.broadcast %166 : f32 to vector<8x128xf32>
    %175 = vector.broadcast %cst_71 : f32 to vector<8x128xf32>
    %176 = arith.select %173, %174, %175 : vector<8x128xi1>, vector<8x128xf32>
    %c0_72 = arith.constant 0 : index
    %c0_73 = arith.constant 0 : index
    %c0_74 = arith.constant 0 : index
    %177 = vector.load %arg3[%c0_72, %c0_73, %c0_74] : memref<1x8x128xf32, #tpu.memory_space<vmem>>, vector<1x8x128xf32>
    %178 = vector.shape_cast %177 : vector<1x8x128xf32> to vector<8x128xf32>
    %179 = vector.shape_cast %176 : vector<8x128xf32> to vector<1x8x128xf32>
    tpu.vector_store %arg3[%c0_72, %c0_73, %c0_74], %179 {strides = array<i32>} : memref<1x8x128xf32, #tpu.memory_space<vmem>>, vector<1x8x128xf32>,
    return
  }
  func.func @transform_0(%arg0: i32) -> (i32, i32, i32, i32) {
    %c0_i32 = arith.constant 0 : i32
    %c0_i32_0 = arith.constant 0 : i32
    %c0_i32_1 = arith.constant 0 : i32
    %c0_i32_2 = arith.constant 0 : i32
    return %arg0, %c0_i32, %c0_i32_0, %c0_i32_1 : i32, i32, i32, i32
  }
  func.func @transform_1(%arg0: i32) -> (i32, i32, i32, i32) {
    %c0_i32 = arith.constant 0 : i32
    %c0_i32_0 = arith.constant 0 : i32
    %c0_i32_1 = arith.constant 0 : i32
    %c0_i32_2 = arith.constant 0 : i32
    return %arg0, %c0_i32, %c0_i32_0, %c0_i32_1 : i32, i32, i32, i32
  }
  func.func @transform_2(%arg0: i32) -> (i32, i32, i32) {
    %c0_i32 = arith.constant 0 : i32
    %c0_i32_0 = arith.constant 0 : i32
    %c0_i32_1 = arith.constant 0 : i32
    return %arg0, %c0_i32, %c0_i32_0 : i32, i32, i32
  }
}

</mosaic_0001>

<llo_original>
// kernel: hsv_channel_loss.1
$region0: #{hsv_channel_loss.1}
  #allocation0 [shape = 'u32[]', space=smem, size = 0x4, offset = 0x4, fixed_abs, tag = 'smem constant byte address 0x4 - core index']
  #allocation1 [shape = 'u32[144,128]{1,0:T(1,128)}', space=vmem, size = 0x12000, scoped, tag = 'internal scratch']
  %s0 = inlined_call_operand.vmem [shape: f32[2,3,16,128], index: 0, kind: input, shape index: {}]
  %s1 = inlined_call_operand.vmem [shape: f32[2,3,16,128], index: 1, kind: input, shape index: {}]
  %s2 = inlined_call_operand.vmem [shape: f32[2,8,128], index: 2, kind: output, shape index: {}]
  %s3 = sld [smem:[#allocation0]]
  $region41: #{hsv_channel_loss.1} parent=0
    _
  %s5 = ssub.s32 1, %s3
  %s6 = scalar_select 0, %s5, %s3
  loop: start=0, step=1, limit=4
  $region2: #{hsv_channel_loss.1} parent=0 // loop_pre_header
    _
  $region3: #{hsv_channel_loss.1} parent=0 // loop_header
    %s8 = sphi 0, %s12
    %p9 = scmp.ge.s32.totalorder %s8, 4
    %s18 = sphi 0, %s20
    %s21 = sphi 0, %s18
    %s22 = sphi 0, %s21
    %s38 = sphi 0, %s22
    %s44 = sphi 0, %s46
    %s47 = sphi 0, %s44
    %s48 = sphi 0, %s47
    %s64 = sphi 0, %s48
    %s70 = sphi 0, %s72
    %s73 = sphi 0, %s70
    %s74 = sphi 0, %s73
    %s90 = sphi 0, %s74
  $region4: #{hsv_channel_loss.1} parent=0 // loop_header_branch
    %11 = sbr.rel (%p9) target = $region8
  $region5: #{hsv_channel_loss.1} parent=0 // loop_body
    %s13 = ssub.s32 %s8, 1
    %s14 = ssub.s32 %s8, 2
    %s15 = sadd.s32 %s8, 1
    %s16 = ssub.s32 %s8, %s15
    %p17 = scmp.eq.s32.totalorder %s16, 0
    %s19 = sadd.s32 %s18, 1
    %s20 = scalar_select %p17, %s18, %s19
    %p23 = pneg %p17
    %p24 = scmp.eq.s32.totalorder %s8, 1
    %p25 = por %p23, %p24
    %p26 = scmp.ne.s32.totalorder %s18, %s21
    %p27 = scmp.eq.s32.totalorder %s8, 0
    %p28 = por %p26, %p27
    %p29 = scmp.ne.s32.totalorder %s18, %s21
    %p30 = scmp.eq.s32.totalorder %s13, 1
    %p31 = por %p29, %p30
    %p32 = scmp.ne.s32.totalorder %s21, %s22
    %p33 = scmp.eq.s32.totalorder %s13, 0
    %p34 = por %p32, %p33
    %p35 = scmp.ne.s32.totalorder %s21, %s22
    %p36 = scmp.eq.s32.totalorder %s14, 1
    %p37 = por %p35, %p36
    %p39 = scmp.ne.s32.totalorder %s22, %s38
    %p40 = scmp.eq.s32.totalorder %s14, 0
    %p41 = por %p39, %p40
    %s42 = ssub.s32 %s8, %s15
    %p43 = scmp.eq.s32.totalorder %s42, 0
    %s45 = sadd.s32 %s44, 1
    %s46 = scalar_select %p43, %s44, %s45
    %p49 = pneg %p43
    %p50 = scmp.eq.s32.totalorder %s8, 1
    %p51 = por %p49, %p50
    %p52 = scmp.ne.s32.totalorder %s44, %s47
    %p53 = scmp.eq.s32.totalorder %s8, 0
    %p54 = por %p52, %p53
    %p55 = scmp.ne.s32.totalorder %s44, %s47
    %p56 = scmp.eq.s32.totalorder %s13, 1
    %p57 = por %p55, %p56
    %p58 = scmp.ne.s32.totalorder %s47, %s48
    %p59 = scmp.eq.s32.totalorder %s13, 0
    %p60 = por %p58, %p59
    %p61 = scmp.ne.s32.totalorder %s47, %s48
    %p62 = scmp.eq.s32.totalorder %s14, 1
    %p63 = por %p61, %p62
    %p65 = scmp.ne.s32.totalorder %s48, %s64
    %p66 = scmp.eq.s32.totalorder %s14, 0
    %p67 = por %p65, %p66
    %s68 = ssub.s32 %s8, %s15
    %p69 = scmp.eq.s32.totalorder %s68, 0
    %s71 = sadd.s32 %s70, 1
    %s72 = scalar_select %p69, %s70, %s71
    %p75 = pneg %p69
    %p76 = scmp.eq.s32.totalorder %s8, 1
    %p77 = por %p75, %p76
    %p78 = scmp.ne.s32.totalorder %s70, %s73
    %p79 = scmp.eq.s32.totalorder %s8, 0
    %p80 = por %p78, %p79
    %p81 = scmp.ne.s32.totalorder %s70, %s73
    %p82 = scmp.eq.s32.totalorder %s13, 1
    %p83 = por %p81, %p82
    %p84 = scmp.ne.s32.totalorder %s73, %s74
    %p85 = scmp.eq.s32.totalorder %s13, 0
    %p86 = por %p84, %p85
    %p87 = scmp.ne.s32.totalorder %s73, %s74
    %p88 = scmp.eq.s32.totalorder %s14, 1
    %p89 = por %p87, %p88
    %p91 = scmp.ne.s32.totalorder %s74, %s90
    %p92 = scmp.eq.s32.totalorder %s14, 0
    %p93 = por %p91, %p92
    %p94 = scmp.le.s32.totalorder 1, %s8
    %p95 = scmp.lt.s32.totalorder %s8, 3
    %p96 = pnand %p94, %p95
    %p97 = pneg %p96
    // Predicated region
    $region9: #{hsv_channel_loss.1} parent=5 // pred_check
      _
    $region10: #{hsv_channel_loss.1} parent=5 // pred_check_branch
      %99 = sbr.rel (%p96) target = $region12
    $region11: #{hsv_channel_loss.1} parent=5 // pred_region
      %s100 = ssub.s32 %s8, 1
    $region12: #{hsv_channel_loss.1} parent=5 // pred_fallthru
      _
    %p101 = scmp.lt.s32.totalorder %s8, 2
    // Predicated region
    $region13: #{hsv_channel_loss.1} parent=5 // pred_check
      %p102 = pneg %p101
    $region14: #{hsv_channel_loss.1} parent=5 // pred_check_branch
      %104 = sbr.rel (%p102) target = $region16
    $region15: #{hsv_channel_loss.1} parent=5 // pred_region
      // Predicated region
      $region17: #{hsv_channel_loss.1} parent=15 // pred_check
        %p105 = pneg %p28
      $region18: #{hsv_channel_loss.1} parent=15 // pred_check_branch
        %107 = sbr.rel (%p105) target = $region20
      $region19: #{hsv_channel_loss.1} parent=15 // pred_region
        %p108 = scmp.lt.s32.totalorder %s8, 1
        %s109 = scalar_select %p108, %s8, 1
        %s110 = smul.addr %s109, 6
        %s111 = smul.addr %s110, 8
        %s112 = scalar_lea.vmem %s0, %s111
      $region20: #{hsv_channel_loss.1} parent=15 // pred_fallthru
        _
      // Predicated region
      $region21: #{hsv_channel_loss.1} parent=15 // pred_check
        %p113 = pneg %p54
      $region22: #{hsv_channel_loss.1} parent=15 // pred_check_branch
        %115 = sbr.rel (%p113) target = $region24
      $region23: #{hsv_channel_loss.1} parent=15 // pred_region
        %p116 = scmp.lt.s32.totalorder %s8, 1
        %s117 = scalar_select %p116, %s8, 1
        %s118 = smul.addr %s117, 6
        %s119 = smul.addr %s118, 8
        %s120 = scalar_lea.vmem %s1, %s119
      $region24: #{hsv_channel_loss.1} parent=15 // pred_fallthru
        _
    $region16: #{hsv_channel_loss.1} parent=5 // pred_fallthru
      _
    %p121 = scmp.le.s32.totalorder 1, %s8
    %p122 = scmp.lt.s32.totalorder %s8, 3
    %p123 = pnand %p121, %p122
    %p124 = pneg %p123
    // Predicated region
    $region25: #{hsv_channel_loss.1} parent=5 // pred_check
      _
    $region26: #{hsv_channel_loss.1} parent=5 // pred_check_branch
      %126 = sbr.rel (%p123) target = $region28
    $region27: #{hsv_channel_loss.1} parent=5 // pred_region
      %s127 = ssub.s32 %s8, 1
      %p128 = scmp.lt.s32.totalorder %s13, 1
      %s129 = scalar_select %p128, %s13, 1
      %s130 = smul.addr %s129, 6
      %s131 = smul.addr %s130, 8
      %s132 = scalar_lea.vmem %s0, %s131
      %p133 = pneg %p34
      %p134 = pneg %p31
      %p135 = scmp.lt.s32.totalorder %s13, 1
      %s136 = scalar_select %p135, %s13, 1
      %s137 = smul.addr %s136, 6
      %s138 = smul.addr %s137, 8
      %s139 = scalar_lea.vmem %s1, %s138
      %p140 = pneg %p60
      %p141 = pneg %p57
      %p142 = pneg %p86
      %p143 = pneg %p83
      %p144 = scmp.lt.s32.totalorder %s13, 1
      %s145 = scalar_select %p144, %s13, 1
      %s146 = smul.addr %s145, 8
      %s147 = scalar_lea.vmem %s2, %s146
      %p148 = scmp.lt.s32.totalorder %s13, 1
      %s149 = scalar_select %p148, %s13, 1
      %s150 = smul.addr %s149, 6
      %s151 = smul.addr %s150, 8
      %s152 = scalar_lea.vmem %s0, %s151
      %p153 = scmp.lt.s32.totalorder %s13, 1
      %s154 = scalar_select %p153, %s13, 1
      %s155 = smul.addr %s154, 6
      %s156 = smul.addr %s155, 8
      %s157 = scalar_lea.vmem %s1, %s156
      %p158 = scmp.lt.s32.totalorder %s13, 1
      %s159 = scalar_select %p158, %s13, 1
      %s160 = smul.addr %s159, 8
      %s161 = scalar_lea.vmem %s2, %s160
      %v162 = vlaneseq
      %v163 = vshrl.u32 %v162, 7
      %v164 = vadd.s32 %v163, 8
      %v165 = vlaneseq
      %v166 = vand.u32 %v165, 127
      %v167 = vsub.s32 %v163, %v166
      %v168 = vsub.s32 %v164, %v166
      %vm169 = vcmp.lt.s32.totalorder %v167, 0
      %v170 = vsub.s32 0, %v167
      %v171 = vsel %vm169, %v170, %v167
      %vm172 = vcmp.lt.s32.totalorder %v168, 0
      %v173 = vsub.s32 0, %v168
      %v174 = vsel %vm172, %v173, %v168
      %vm175 = vcmp.le.s32.totalorder %v171, 7
      %vm176 = vcmp.le.s32.totalorder %v174, 7
      %vm177 = vcmp.lt.s32.totalorder %v163, 16
      %vm178 = vcmp.lt.s32.totalorder %v164, 16
      %vm179 = vmand %vm175, %vm177
      %vm180 = vmand %vm176, %vm178
      %v181 = vsel %vm179, 1.0, 0.0
      %v182 = vsel %vm180, 1.0, 0.0
      %v183 = vadd.s32 %v163, 16
      %v184 = vadd.s32 %v163, 24
      %v185 = vadd.s32 %v163, 32
      %v186 = vadd.s32 %v163, 40
      %v187 = vadd.s32 %v163, 48
      %v188 = vadd.s32 %v163, 56
      %v189 = vadd.s32 %v163, 64
      %v190 = vadd.s32 %v163, 72
      %v191 = vadd.s32 %v163, 80
      %v192 = vadd.s32 %v163, 88
      %v193 = vadd.s32 %v163, 96
      %v194 = vadd.s32 %v163, 104
      %v195 = vadd.s32 %v163, 112
      %v196 = vadd.s32 %v163, 120
      %v197 = vsub.s32 %v183, %v166
      %v198 = vsub.s32 %v184, %v166
      %v199 = vsub.s32 %v185, %v166
      %v200 = vsub.s32 %v186, %v166
      %v201 = vsub.s32 %v187, %v166
      %v202 = vsub.s32 %v188, %v166
      %v203 = vsub.s32 %v189, %v166
      %v204 = vsub.s32 %v190, %v166
      %v205 = vsub.s32 %v191, %v166
      %v206 = vsub.s32 %v192, %v166
      %v207 = vsub.s32 %v193, %v166
      %v208 = vsub.s32 %v194, %v166
      %v209 = vsub.s32 %v195, %v166
      %v210 = vsub.s32 %v196, %v166
      %vm211 = vcmp.lt.s32.totalorder %v197, 0
      %v212 = vsub.s32 0, %v197
      %v213 = vsel %vm211, %v212, %v197
      %vm214 = vcmp.lt.s32.totalorder %v198, 0
      %v215 = vsub.s32 0, %v198
      %v216 = vsel %vm214, %v215, %v198
      %vm217 = vcmp.lt.s32.totalorder %v199, 0
      %v218 = vsub.s32 0, %v199
      %v219 = vsel %vm217, %v218, %v199
      %vm220 = vcmp.lt.s32.totalorder %v200, 0
      %v221 = vsub.s32 0, %v200
      %v222 = vsel %vm220, %v221, %v200
      %vm223 = vcmp.lt.s32.totalorder %v201, 0
      %v224 = vsub.s32 0, %v201
      %v225 = vsel %vm223, %v224, %v201
      %vm226 = vcmp.lt.s32.totalorder %v202, 0
      %v227 = vsub.s32 0, %v202
      %v228 = vsel %vm226, %v227, %v202
      %vm229 = vcmp.lt.s32.totalorder %v203, 0
      %v230 = vsub.s32 0, %v203
      %v231 = vsel %vm229, %v230, %v203
      %vm232 = vcmp.lt.s32.totalorder %v204, 0
      %v233 = vsub.s32 0, %v204
      %v234 = vsel %vm232, %v233, %v204
      %vm235 = vcmp.lt.s32.totalorder %v205, 0
      %v236 = vsub.s32 0, %v205
      %v237 = vsel %vm235, %v236, %v205
      %vm238 = vcmp.lt.s32.totalorder %v206, 0
      %v239 = vsub.s32 0, %v206
      %v240 = vsel %vm238, %v239, %v206
      %vm241 = vcmp.lt.s32.totalorder %v207, 0
      %v242 = vsub.s32 0, %v207
      %v243 = vsel %vm241, %v242, %v207
      %vm244 = vcmp.lt.s32.totalorder %v208, 0
      %v245 = vsub.s32 0, %v208
      %v246 = vsel %vm244, %v245, %v208
      %vm247 = vcmp.lt.s32.totalorder %v209, 0
      %v248 = vsub.s32 0, %v209
      %v249 = vsel %vm247, %v248, %v209
      %vm250 = vcmp.lt.s32.totalorder %v210, 0
      %v251 = vsub.s32 0, %v210
      %v252 = vsel %vm250, %v251, %v210
      %vm253 = vcmp.le.s32.totalorder %v213, 7
      %vm254 = vcmp.le.s32.totalorder %v216, 7
      %vm255 = vcmp.le.s32.totalorder %v219, 7
      %vm256 = vcmp.le.s32.totalorder %v222, 7
      %vm257 = vcmp.le.s32.totalorder %v225, 7
      %vm258 = vcmp.le.s32.totalorder %v228, 7
      %vm259 = vcmp.le.s32.totalorder %v231, 7
      %vm260 = vcmp.le.s32.totalorder %v234, 7
      %vm261 = vcmp.le.s32.totalorder %v237, 7
      %vm262 = vcmp.le.s32.totalorder %v240, 7
      %vm263 = vcmp.le.s32.totalorder %v243, 7
      %vm264 = vcmp.le.s32.totalorder %v246, 7
      %vm265 = vcmp.le.s32.totalorder %v249, 7
      %vm266 = vcmp.le.s32.totalorder %v252, 7
      %vm267 = vcmp.lt.s32.totalorder %v166, 16
      %vm268 = vmand %vm175, %vm267
      %vm269 = vmand %vm176, %vm267
      %vm270 = vmand %vm253, %vm267
      %vm271 = vmand %vm254, %vm267
      %vm272 = vmand %vm255, %vm267
      %vm273 = vmand %vm256, %vm267
      %vm274 = vmand %vm257, %vm267
      %vm275 = vmand %vm258, %vm267
      %vm276 = vmand %vm259, %vm267
      %vm277 = vmand %vm260, %vm267
      %vm278 = vmand %vm261, %vm267
      %vm279 = vmand %vm262, %vm267
      %vm280 = vmand %vm263, %vm267
      %vm281 = vmand %vm264, %vm267
      %vm282 = vmand %vm265, %vm267
      %vm283 = vmand %vm266, %vm267
      %v284 = vsel %vm268, 1.0, 0.0
      %v285 = vsel %vm269, 1.0, 0.0
      %v286 = vsel %vm270, 1.0, 0.0
      %v287 = vsel %vm271, 1.0, 0.0
      %v288 = vsel %vm272, 1.0, 0.0
      %v289 = vsel %vm273, 1.0, 0.0
      %v290 = vsel %vm274, 1.0, 0.0
      %v291 = vsel %vm275, 1.0, 0.0
      %v292 = vsel %vm276, 1.0, 0.0
      %v293 = vsel %vm277, 1.0, 0.0
      %v294 = vsel %vm278, 1.0, 0.0
      %v295 = vsel %vm279, 1.0, 0.0
      %v296 = vsel %vm280, 1.0, 0.0
      %v297 = vsel %vm281, 1.0, 0.0
      %v298 = vsel %vm282, 1.0, 0.0
      %v299 = vsel %vm283, 1.0, 0.0
      %vm300 = vmand %vm177, %vm267
      %vm301 = vmand %vm178, %vm267
      %v302 = vsel %vm300, 1.0, 0.0
      %v303 = vsel %vm301, 1.0, 0.0
      %v304 = vld [vmem:[%s152] sm:$0xff]
      %v305 = vld [vmem:[%s152 + $0x8] sm:$0xff]
      %s306 = scalar_lea.vmem %s152, 16
      %v307 = vld [vmem:[%s306] sm:$0xff]
      %v308 = vld [vmem:[%s306 + $0x8] sm:$0xff]
      %s309 = scalar_lea.vmem %s152, 32
      %v310 = vld [vmem:[%s309] sm:$0xff]
      %v311 = vld [vmem:[%s309 + $0x8] sm:$0xff]
      %v312 = vmax.f32 %v304, %v307
      %v313 = vmax.f32 %v305, %v308
      %v314 = vmax.f32 %v312, %v310
      %v315 = vmax.f32 %v313, %v311
      %v316 = vmin.f32 %v304, %v307
      %v317 = vmin.f32 %v305, %v308
      %v318 = vmin.f32 %v316, %v310
      %v319 = vmin.f32 %v317, %v311
      %v320 = vsub.f32 %v314, %v318
      %v321 = vsub.f32 %v315, %v319
      %v322 = vld [vmem:[%s157] sm:$0xff]
      %v323 = vld [vmem:[%s157 + $0x8] sm:$0xff]
      %s324 = scalar_lea.vmem %s157, 16
      %v325 = vld [vmem:[%s324] sm:$0xff]
      %v326 = vld [vmem:[%s324 + $0x8] sm:$0xff]
      %s327 = scalar_lea.vmem %s157, 32
      %v328 = vld [vmem:[%s327] sm:$0xff]
      %v329 = vld [vmem:[%s327 + $0x8] sm:$0xff]
      %v330 = vmax.f32 %v322, %v325
      %v331 = vmax.f32 %v323, %v326
      %v332 = vmax.f32 %v330, %v328
      %v333 = vmax.f32 %v331, %v329
      %v334 = vmin.f32 %v322, %v325
      %v335 = vmin.f32 %v323, %v326
      %v336 = vmin.f32 %v334, %v328
      %v337 = vmin.f32 %v335, %v329
      %v338 = vsub.f32 %v332, %v336
      %v339 = vsub.f32 %v333, %v337
      %vm340 = vcmp.gt.f32.partialorder %v320, 0.0
      %vm341 = vcmp.gt.f32.partialorder %v321, 0.0
      %v342 = vsel %vm340, %v320, 1.0
      %v343 = vsel %vm341, %v321, 1.0
      %vm344 = vcmp.eq.f32.partialorder %v314, %v304
      %vm345 = vcmp.eq.f32.partialorder %v315, %v305
      %v346 = vsub.f32 %v307, %v310
      %v347 = vsub.f32 %v308, %v311
      %v348 = vrcp.pop %v342
      %v349 = vmul.f32 %v346, %v348
      %v350 = vrcp.pop %v343
      %v351 = vmul.f32 %v347, %v350
      %vm352 = vcmp.eq.f32.partialorder %v314, %v307
      %vm353 = vcmp.eq.f32.partialorder %v315, %v308
      %v354 = vsub.f32 %v310, %v304
      %v355 = vsub.f32 %v311, %v305
      %v356 = vmul.f32 %v354, %v348
      %v357 = vmul.f32 %v355, %v350
      %v358 = vadd.f32 %v356, 2.0
      %v359 = vadd.f32 %v357, 2.0
      %v360 = vsub.f32 %v304, %v307
      %v361 = vsub.f32 %v305, %v308
      %v362 = vmul.f32 %v360, %v348
      %v363 = vmul.f32 %v361, %v350
      %v364 = vadd.f32 %v362, 4.0
      %v365 = vadd.f32 %v363, 4.0
      %v366 = vsel %vm352, %v358, %v364
      %v367 = vsel %vm353, %v359, %v365
      %v368 = vsel %vm344, %v349, %v366
      %v369 = vsel %vm345, %v351, %v367
      %v370 = vmul.f32 %v368, 60.0
      %v371 = vmul.f32 %v369, 60.0
      %vm372 = vcmp.lt.f32.partialorder %v370, 0.0
      %vm373 = vcmp.lt.f32.partialorder %v371, 0.0
      %v374 = vadd.f32 %v370, 360.0
      %v375 = vadd.f32 %v371, 360.0
      %v376 = vsel %vm372, %v374, %v370
      %v377 = vsel %vm373, %v375, %v371
      %v378 = vsel %vm340, %v376, 0.0
      %v379 = vsel %vm341, %v377, 0.0
      %v380 = vmul.f32 %v378, 0.005586592
      %v381 = vmul.f32 %v379, 0.005586592
      %vm382 = vcmp.gt.f32.partialorder %v338, 0.0
      %vm383 = vcmp.gt.f32.partialorder %v339, 0.0
      %v384 = vsel %vm382, %v338, 1.0
      %v385 = vsel %vm383, %v339, 1.0
      %vm386 = vcmp.eq.f32.partialorder %v332, %v322
      %vm387 = vcmp.eq.f32.partialorder %v333, %v323
      %v388 = vsub.f32 %v325, %v328
      %v389 = vsub.f32 %v326, %v329
      %v390 = vrcp.pop %v384
      %v391 = vmul.f32 %v388, %v390
      %v392 = vrcp.pop %v385
      %v393 = vmul.f32 %v389, %v392
      %vm394 = vcmp.eq.f32.partialorder %v332, %v325
      %vm395 = vcmp.eq.f32.partialorder %v333, %v326
      %v396 = vsub.f32 %v328, %v322
      %v397 = vsub.f32 %v329, %v323
      %v398 = vmul.f32 %v396, %v390
      %v399 = vmul.f32 %v397, %v392
      %v400 = vadd.f32 %v398, 2.0
      %v401 = vadd.f32 %v399, 2.0
      %v402 = vsub.f32 %v322, %v325
      %v403 = vsub.f32 %v323, %v326
      %v404 = vmul.f32 %v402, %v390
      %v405 = vmul.f32 %v403, %v392
      %v406 = vadd.f32 %v404, 4.0
      %v407 = vadd.f32 %v405, 4.0
      %v408 = vsel %vm394, %v400, %v406
      %v409 = vsel %vm395, %v401, %v407
      %v410 = vsel %vm386, %v391, %v408
      %v411 = vsel %vm387, %v393, %v409
      %v412 = vmul.f32 %v410, 60.0
      %v413 = vmul.f32 %v411, 60.0
      %vm414 = vcmp.lt.f32.partialorder %v412, 0.0
      %vm415 = vcmp.lt.f32.partialorder %v413, 0.0
      %v416 = vadd.f32 %v412, 360.0
      %v417 = vadd.f32 %v413, 360.0
      %v418 = vsel %vm414, %v416, %v412
      %v419 = vsel %vm415, %v417, %v413
      %v420 = vsel %vm382, %v418, 0.0
      %v421 = vsel %vm383, %v419, 0.0
      %v422 = vmul.f32 %v420, 0.005586592
      %v423 = vmul.f32 %v421, 0.005586592
      %v424 = vsub.f32 %v380, %v422
      %v425 = vsub.f32 %v381, %v423
      %v426 = vmul.f32 %v424, %v302
      %v427 = vmul.f32 %v425, %v303
      %428 = vmatprep.subr.mxu0 0.0
      %429 = vmatpush1.msra.mxu0 %v299
      %430 = vmatprep.subr.mxu0 0.0
      %431 = vmatpush1.msra.mxu0 %v298
      %432 = vmatprep.subr.mxu0 0.0
      %433 = vmatpush1.msra.mxu0 %v297
      %434 = vmatprep.subr.mxu0 0.0
      %435 = vmatpush1.msra.mxu0 %v296
      %436 = vmatprep.subr.mxu0 0.0
      %437 = vmatpush1.msra.mxu0 %v295
      %438 = vmatprep.subr.mxu0 0.0
      %439 = vmatpush1.msra.mxu0 %v294
      %440 = vmatprep.subr.mxu0 0.0
      %441 = vmatpush1.msra.mxu0 %v293
      %442 = vmatprep.subr.mxu0 0.0
      %443 = vmatpush1.msra.mxu0 %v292
      %444 = vmatprep.subr.mxu0 0.0
      %445 = vmatpush1.msra.mxu0 %v291
      %446 = vmatprep.subr.mxu0 0.0
      %447 = vmatpush1.msra.mxu0 %v290
      %448 = vmatprep.subr.mxu0 0.0
      %449 = vmatpush1.msra.mxu0 %v289
      %450 = vmatprep.subr.mxu0 0.0
      %451 = vmatpush1.msra.mxu0 %v288
      %452 = vmatprep.subr.mxu0 0.0
      %453 = vmatpush1.msra.mxu0 %v287
      %454 = vmatprep.subr.mxu0 0.0
      %455 = vmatpush1.msra.mxu0 %v286
      %456 = vmatprep.subr.mxu0 0.0
      %457 = vmatpush1.msra.mxu0 %v285
      %458 = vmatprep.subr.mxu0 0.0
      %459 = vmatpush1.msra.mxu0 %v284
      %460 = vmatprep.subr.mxu0 0.0
      %461 = vmatpush2.msra.mxu0 0.0
      %462 = vmatprep.subr.mxu0 0.0
      %463 = vmatpush2.msra.mxu0 0.0
      %464 = vmatprep.subr.mxu0 0.0
      %465 = vmatpush2.msra.mxu0 0.0
      %466 = vmatprep.subr.mxu0 0.0
      %467 = vmatpush2.msra.mxu0 0.0
      %468 = vmatprep.subr.mxu0 0.0
      %469 = vmatpush2.msra.mxu0 0.0
      %470 = vmatprep.subr.mxu0 0.0
      %471 = vmatpush2.msra.mxu0 0.0
      %472 = vmatprep.subr.mxu0 0.0
      %473 = vmatpush2.msra.mxu0 0.0
      %474 = vmatprep.subr.mxu0 0.0
      %475 = vmatpush2.msra.mxu0 0.0
      %476 = vmatprep.subr.mxu0 0.0
      %477 = vmatpush2.msra.mxu0 0.0
      %478 = vmatprep.subr.mxu0 0.0
      %479 = vmatpush2.msra.mxu0 0.0
      %480 = vmatprep.subr.mxu0 0.0
      %481 = vmatpush2.msra.mxu0 0.0
      %482 = vmatprep.subr.mxu0 0.0
      %483 = vmatpush2.msra.mxu0 0.0
      %484 = vmatprep.subr.mxu0 0.0
      %485 = vmatpush2.msra.mxu0 0.0
      %486 = vmatprep.subr.mxu0 0.0
      %487 = vmatpush2.msra.mxu0 0.0
      %488 = vmatprep.subr.mxu0 0.0
      %489 = vmatpush2.msra.mxu0 0.0
      %490 = vmatprep.subr.mxu0 0.0
      %491 = vmatpush2.msra.mxu0 0.0
      %492 = vmatprep.mubr.f32.mxu0 0.0
      %493 = vmatmul.mubr.f32.gmra.mxu0 %v426
      %v494 = vpop.f32.mrf.mxu0
      %v495 = vadd.f32 0.0, %v494
      %v496 = vpop.f32.mrf.mxu0
      %497 = vmatprep.mubr.f32.mxu0 0.0
      %498 = vmatmul.mubr.f32.gmra.mxu0 %v427
      %v499 = vpop.f32.mrf.mxu0
      %v500 = vadd.f32 0.0, %v499
      %v501 = vpop.f32.mrf.mxu0
      %502 = vdwg.mxu0
      %vm503 = vcmask 130048
      %v505 = vsel %vm503, %v181, 0
      %v508 = vsel %vm503, %v182, 0
      %510 = vmatprep.subr.mxu0 0.0
      %511 = vmatpush1.msra.mxu0 0.0
      %512 = vmatprep.subr.mxu0 0.0
      %513 = vmatpush1.msra.mxu0 0.0
      %514 = vmatprep.subr.mxu0 0.0
      %515 = vmatpush1.msra.mxu0 0.0
      %516 = vmatprep.subr.mxu0 0.0
      %517 = vmatpush1.msra.mxu0 0.0
      %518 = vmatprep.subr.mxu0 0.0
      %519 = vmatpush1.msra.mxu0 0.0
      %520 = vmatprep.subr.mxu0 0.0
      %521 = vmatpush1.msra.mxu0 0.0
      %522 = vmatprep.subr.mxu0 0.0
      %523 = vmatpush1.msra.mxu0 0.0
      %524 = vmatprep.subr.mxu0 0.0
      %525 = vmatpush1.msra.mxu0 0.0
      %526 = vmatprep.subr.mxu0 0.0
      %527 = vmatpush1.msra.mxu0 0.0
      %528 = vmatprep.subr.mxu0 0.0
      %529 = vmatpush1.msra.mxu0 0.0
      %530 = vmatprep.subr.mxu0 0.0
      %531 = vmatpush1.msra.mxu0 0.0
      %532 = vmatprep.subr.mxu0 0.0
      %533 = vmatpush1.msra.mxu0 0.0
      %534 = vmatprep.subr.mxu0 0.0
      %535 = vmatpush1.msra.mxu0 0.0
      %536 = vmatprep.subr.mxu0 0.0
      %537 = vmatpush1.msra.mxu0 0.0
      %538 = vmatprep.subr.mxu0 0.0
      %539 = vmatpush1.msra.mxu0 %v500
      %540 = vmatprep.subr.mxu0 0.0
      %541 = vmatpush1.msra.mxu0 %v495
      %542 = vmatprep.subr.mxu0 0.0
      %543 = vmatpush2.msra.mxu0 0.0
      %544 = vmatprep.subr.mxu0 0.0
      %545 = vmatpush2.msra.mxu0 0.0
      %546 = vmatprep.subr.mxu0 0.0
      %547 = vmatpush2.msra.mxu0 0.0
      %548 = vmatprep.subr.mxu0 0.0
      %549 = vmatpush2.msra.mxu0 0.0
      %550 = vmatprep.subr.mxu0 0.0
      %551 = vmatpush2.msra.mxu0 0.0
      %552 = vmatprep.subr.mxu0 0.0
      %553 = vmatpush2.msra.mxu0 0.0
      %554 = vmatprep.subr.mxu0 0.0
      %555 = vmatpush2.msra.mxu0 0.0
      %556 = vmatprep.subr.mxu0 0.0
      %557 = vmatpush2.msra.mxu0 0.0
      %558 = vmatprep.subr.mxu0 0.0
      %559 = vmatpush2.msra.mxu0 0.0
      %560 = vmatprep.subr.mxu0 0.0
      %561 = vmatpush2.msra.mxu0 0.0
      %562 = vmatprep.subr.mxu0 0.0
      %563 = vmatpush2.msra.mxu0 0.0
      %564 = vmatprep.subr.mxu0 0.0
      %565 = vmatpush2.msra.mxu0 0.0
      %566 = vmatprep.subr.mxu0 0.0
      %567 = vmatpush2.msra.mxu0 0.0
      %568 = vmatprep.subr.mxu0 0.0
      %569 = vmatpush2.msra.mxu0 0.0
      %570 = vmatprep.subr.mxu0 0.0
      %571 = vmatpush2.msra.mxu0 0.0
      %572 = vmatprep.subr.mxu0 0.0
      %573 = vmatpush2.msra.mxu0 0.0
      %574 = vmatprep.mubr.f32.mxu0 0.0
      %575 = vmatmul.mubr.f32.gmra.mxu0 %v505
      %v576 = vpop.f32.mrf.mxu0
      %v577 = vadd.f32 0.0, %v576
      %v578 = vpop.f32.mrf.mxu0
      %579 = vmatprep.mubr.f32.mxu0 0.0
      %580 = vmatmul.mubr.f32.gmra.mxu0 %v508
      %v581 = vpop.f32.mrf.mxu0
      %v582 = vadd.f32 0.0, %v581
      %v583 = vpop.f32.mrf.mxu0
      %584 = vdwg.mxu0
      %v585 = vmul.f32 %v577, %v577
      %v586 = vmul.f32 %v582, %v582
      %v587 = vadd.f32 %v585, 0.0
      %v588 = vadd.f32 %v586, 0.0
      %vm589 = vcmp.gt.f32.partialorder %v314, 0.0
      %vm590 = vcmp.gt.f32.partialorder %v315, 0.0
      %v591 = vsel %vm589, %v314, 1.0
      %v592 = vsel %vm590, %v315, 1.0
      %v593 = vrcp.pop %v591
      %v594 = vmul.f32 %v320, %v593
      %v595 = vrcp.pop %v592
      %v596 = vmul.f32 %v321, %v595
      %v597 = vsel %vm589, %v594, 0.0
      %v598 = vsel %vm590, %v596, 0.0
      %v599 = vmul.f32 %v597, 0.003921569
      %v600 = vmul.f32 %v598, 0.003921569
      %vm601 = vcmp.gt.f32.partialorder %v332, 0.0
      %vm602 = vcmp.gt.f32.partialorder %v333, 0.0
      %v603 = vsel %vm601, %v332, 1.0
      %v604 = vsel %vm602, %v333, 1.0
      %v605 = vrcp.pop %v603
      %v606 = vmul.f32 %v338, %v605
      %v607 = vrcp.pop %v604
      %v608 = vmul.f32 %v339, %v607
      %v609 = vsel %vm601, %v606, 0.0
      %v610 = vsel %vm602, %v608, 0.0
      %v611 = vmul.f32 %v609, 0.003921569
      %v612 = vmul.f32 %v610, 0.003921569
      %v613 = vsub.f32 %v599, %v611
      %v614 = vsub.f32 %v600, %v612
      %v615 = vmul.f32 %v613, %v302
      %v616 = vmul.f32 %v614, %v303
      %617 = vmatprep.subr.mxu0 0.0
      %618 = vmatpush1.msra.mxu0 %v299
      %619 = vmatprep.subr.mxu0 0.0
      %620 = vmatpush1.msra.mxu0 %v298
      %621 = vmatprep.subr.mxu0 0.0
      %622 = vmatpush1.msra.mxu0 %v297
      %623 = vmatprep.subr.mxu0 0.0
      %624 = vmatpush1.msra.mxu0 %v296
      %625 = vmatprep.subr.mxu0 0.0
      %626 = vmatpush1.msra.mxu0 %v295
      %627 = vmatprep.subr.mxu0 0.0
      %628 = vmatpush1.msra.mxu0 %v294
      %629 = vmatprep.subr.mxu0 0.0
      %630 = vmatpush1.msra.mxu0 %v293
      %631 = vmatprep.subr.mxu0 0.0
      %632 = vmatpush1.msra.mxu0 %v292
      %633 = vmatprep.subr.mxu0 0.0
      %634 = vmatpush1.msra.mxu0 %v291
      %635 = vmatprep.subr.mxu0 0.0
      %636 = vmatpush1.msra.mxu0 %v290
      %637 = vmatprep.subr.mxu0 0.0
      %638 = vmatpush1.msra.mxu0 %v289
      %639 = vmatprep.subr.mxu0 0.0
      %640 = vmatpush1.msra.mxu0 %v288
      %641 = vmatprep.subr.mxu0 0.0
      %642 = vmatpush1.msra.mxu0 %v287
      %643 = vmatprep.subr.mxu0 0.0
      %644 = vmatpush1.msra.mxu0 %v286
      %645 = vmatprep.subr.mxu0 0.0
      %646 = vmatpush1.msra.mxu0 %v285
      %647 = vmatprep.subr.mxu0 0.0
      %648 = vmatpush1.msra.mxu0 %v284
      %649 = vmatprep.subr.mxu0 0.0
      %650 = vmatpush2.msra.mxu0 0.0
      %651 = vmatprep.subr.mxu0 0.0
      %652 = vmatpush2.msra.mxu0 0.0
      %653 = vmatprep.subr.mxu0 0.0
      %654 = vmatpush2.msra.mxu0 0.0
      %655 = vmatprep.subr.mxu0 0.0
      %656 = vmatpush2.msra.mxu0 0.0
      %657 = vmatprep.subr.mxu0 0.0
      %658 = vmatpush2.msra.mxu0 0.0
      %659 = vmatprep.subr.mxu0 0.0
      %660 = vmatpush2.msra.mxu0 0.0
      %661 = vmatprep.subr.mxu0 0.0
      %662 = vmatpush2.msra.mxu0 0.0
      %663 = vmatprep.subr.mxu0 0.0
      %664 = vmatpush2.msra.mxu0 0.0
      %665 = vmatprep.subr.mxu0 0.0
      %666 = vmatpush2.msra.mxu0 0.0
      %667 = vmatprep.subr.mxu0 0.0
      %668 = vmatpush2.msra.mxu0 0.0
      %669 = vmatprep.subr.mxu0 0.0
      %670 = vmatpush2.msra.mxu0 0.0
      %671 = vmatprep.subr.mxu0 0.0
      %672 = vmatpush2.msra.mxu0 0.0
      %673 = vmatprep.subr.mxu0 0.0
      %674 = vmatpush2.msra.mxu0 0.0
      %675 = vmatprep.subr.mxu0 0.0
      %676 = vmatpush2.msra.mxu0 0.0
      %677 = vmatprep.subr.mxu0 0.0
      %678 = vmatpush2.msra.mxu0 0.0
      %679 = vmatprep.subr.mxu0 0.0
      %680 = vmatpush2.msra.mxu0 0.0
      %681 = vmatprep.mubr.f32.mxu0 0.0
      %682 = vmatmul.mubr.f32.gmra.mxu0 %v615
      %v683 = vpop.f32.mrf.mxu0
      %v684 = vadd.f32 0.0, %v683
      %v685 = vpop.f32.mrf.mxu0
      %686 = vmatprep.mubr.f32.mxu0 0.0
      %687 = vmatmul.mubr.f32.gmra.mxu0 %v616
      %v688 = vpop.f32.mrf.mxu0
      %v689 = vadd.f32 0.0, %v688
      %v690 = vpop.f32.mrf.mxu0
      %691 = vdwg.mxu0
      %692 = vmatprep.subr.mxu0 0.0
      %693 = vmatpush1.msra.mxu0 0.0
      %694 = vmatprep.subr.mxu0 0.0
      %695 = vmatpush1.msra.mxu0 0.0
      %696 = vmatprep.subr.mxu0 0.0
      %697 = vmatpush1.msra.mxu0 0.0
      %698 = vmatprep.subr.mxu0 0.0
      %699 = vmatpush1.msra.mxu0 0.0
      %700 = vmatprep.subr.mxu0 0.0
      %701 = vmatpush1.msra.mxu0 0.0
      %702 = vmatprep.subr.mxu0 0.0
      %703 = vmatpush1.msra.mxu0 0.0
      %704 = vmatprep.subr.mxu0 0.0
      %705 = vmatpush1.msra.mxu0 0.0
      %706 = vmatprep.subr.mxu0 0.0
      %707 = vmatpush1.msra.mxu0 0.0
      %708 = vmatprep.subr.mxu0 0.0
      %709 = vmatpush1.msra.mxu0 0.0
      %710 = vmatprep.subr.mxu0 0.0
      %711 = vmatpush1.msra.mxu0 0.0
      %712 = vmatprep.subr.mxu0 0.0
      %713 = vmatpush1.msra.mxu0 0.0
      %714 = vmatprep.subr.mxu0 0.0
      %715 = vmatpush1.msra.mxu0 0.0
      %716 = vmatprep.subr.mxu0 0.0
      %717 = vmatpush1.msra.mxu0 0.0
      %718 = vmatprep.subr.mxu0 0.0
      %719 = vmatpush1.msra.mxu0 0.0
      %720 = vmatprep.subr.mxu0 0.0
      %721 = vmatpush1.msra.mxu0 %v689
      %722 = vmatprep.subr.mxu0 0.0
      %723 = vmatpush1.msra.mxu0 %v684
      %724 = vmatprep.subr.mxu0 0.0
      %725 = vmatpush2.msra.mxu0 0.0
      %726 = vmatprep.subr.mxu0 0.0
      %727 = vmatpush2.msra.mxu0 0.0
      %728 = vmatprep.subr.mxu0 0.0
      %729 = vmatpush2.msra.mxu0 0.0
      %730 = vmatprep.subr.mxu0 0.0
      %731 = vmatpush2.msra.mxu0 0.0
      %732 = vmatprep.subr.mxu0 0.0
      %733 = vmatpush2.msra.mxu0 0.0
      %734 = vmatprep.subr.mxu0 0.0
      %735 = vmatpush2.msra.mxu0 0.0
      %736 = vmatprep.subr.mxu0 0.0
      %737 = vmatpush2.msra.mxu0 0.0
      %738 = vmatprep.subr.mxu0 0.0
      %739 = vmatpush2.msra.mxu0 0.0
      %740 = vmatprep.subr.mxu0 0.0
      %741 = vmatpush2.msra.mxu0 0.0
      %742 = vmatprep.subr.mxu0 0.0
      %743 = vmatpush2.msra.mxu0 0.0
      %744 = vmatprep.subr.mxu0 0.0
      %745 = vmatpush2.msra.mxu0 0.0
      %746 = vmatprep.subr.mxu0 0.0
      %747 = vmatpush2.msra.mxu0 0.0
      %748 = vmatprep.subr.mxu0 0.0
      %749 = vmatpush2.msra.mxu0 0.0
      %750 = vmatprep.subr.mxu0 0.0
      %751 = vmatpush2.msra.mxu0 0.0
      %752 = vmatprep.subr.mxu0 0.0
      %753 = vmatpush2.msra.mxu0 0.0
      %754 = vmatprep.subr.mxu0 0.0
      %755 = vmatpush2.msra.mxu0 0.0
      %756 = vmatprep.mubr.f32.mxu0 0.0
      %757 = vmatmul.mubr.f32.gmra.mxu0 %v505
      %v758 = vpop.f32.mrf.mxu0
      %v759 = vadd.f32 0.0, %v758
      %v760 = vpop.f32.mrf.mxu0
      %761 = vmatprep.mubr.f32.mxu0 0.0
      %762 = vmatmul.mubr.f32.gmra.mxu0 %v508
      %v763 = vpop.f32.mrf.mxu0
      %v764 = vadd.f32 0.0, %v763
      %v765 = vpop.f32.mrf.mxu0
      %766 = vdwg.mxu0
      %v767 = vmul.f32 %v759, %v759
      %v768 = vmul.f32 %v764, %v764
      %v769 = vadd.f32 %v587, %v767
      %v770 = vadd.f32 %v588, %v768
      %v771 = vmul.f32 %v314, 0.003921569
      %v772 = vmul.f32 %v315, 0.003921569
      %v773 = vmul.f32 %v332, 0.003921569
      %v774 = vmul.f32 %v333, 0.003921569
      %v775 = vsub.f32 %v771, %v773
      %v776 = vsub.f32 %v772, %v774
      %v777 = vmul.f32 %v775, %v302
      %v778 = vmul.f32 %v776, %v303
      %779 = vmatprep.subr.mxu0 0.0
      %780 = vmatpush1.msra.mxu0 %v299
      %781 = vmatprep.subr.mxu0 0.0
      %782 = vmatpush1.msra.mxu0 %v298
      %783 = vmatprep.subr.mxu0 0.0
      %784 = vmatpush1.msra.mxu0 %v297
      %785 = vmatprep.subr.mxu0 0.0
      %786 = vmatpush1.msra.mxu0 %v296
      %787 = vmatprep.subr.mxu0 0.0
      %788 = vmatpush1.msra.mxu0 %v295
      %789 = vmatprep.subr.mxu0 0.0
      %790 = vmatpush1.msra.mxu0 %v294
      %791 = vmatprep.subr.mxu0 0.0
      %792 = vmatpush1.msra.mxu0 %v293
      %793 = vmatprep.subr.mxu0 0.0
      %794 = vmatpush1.msra.mxu0 %v292
      %795 = vmatprep.subr.mxu0 0.0
      %796 = vmatpush1.msra.mxu0 %v291
      %797 = vmatprep.subr.mxu0 0.0
      %798 = vmatpush1.msra.mxu0 %v290
      %799 = vmatprep.subr.mxu0 0.0
      %800 = vmatpush1.msra.mxu0 %v289
      %801 = vmatprep.subr.mxu0 0.0
      %802 = vmatpush1.msra.mxu0 %v288
      %803 = vmatprep.subr.mxu0 0.0
      %804 = vmatpush1.msra.mxu0 %v287
      %805 = vmatprep.subr.mxu0 0.0
      %806 = vmatpush1.msra.mxu0 %v286
      %807 = vmatprep.subr.mxu0 0.0
      %808 = vmatpush1.msra.mxu0 %v285
      %809 = vmatprep.subr.mxu0 0.0
      %810 = vmatpush1.msra.mxu0 %v284
      %811 = vmatprep.subr.mxu0 0.0
      %812 = vmatpush2.msra.mxu0 0.0
      %813 = vmatprep.subr.mxu0 0.0
      %814 = vmatpush2.msra.mxu0 0.0
      %815 = vmatprep.subr.mxu0 0.0
      %816 = vmatpush2.msra.mxu0 0.0
      %817 = vmatprep.subr.mxu0 0.0
      %818 = vmatpush2.msra.mxu0 0.0
      %819 = vmatprep.subr.mxu0 0.0
      %820 = vmatpush2.msra.mxu0 0.0
      %821 = vmatprep.subr.mxu0 0.0
      %822 = vmatpush2.msra.mxu0 0.0
      %823 = vmatprep.subr.mxu0 0.0
      %824 = vmatpush2.msra.mxu0 0.0
      %825 = vmatprep.subr.mxu0 0.0
      %826 = vmatpush2.msra.mxu0 0.0
      %827 = vmatprep.subr.mxu0 0.0
      %828 = vmatpush2.msra.mxu0 0.0
      %829 = vmatprep.subr.mxu0 0.0
      %830 = vmatpush2.msra.mxu0 0.0
      %831 = vmatprep.subr.mxu0 0.0
      %832 = vmatpush2.msra.mxu0 0.0
      %833 = vmatprep.subr.mxu0 0.0
      %834 = vmatpush2.msra.mxu0 0.0
      %835 = vmatprep.subr.mxu0 0.0
      %836 = vmatpush2.msra.mxu0 0.0
      %837 = vmatprep.subr.mxu0 0.0
      %838 = vmatpush2.msra.mxu0 0.0
      %839 = vmatprep.subr.mxu0 0.0
      %840 = vmatpush2.msra.mxu0 0.0
      %841 = vmatprep.subr.mxu0 0.0
      %842 = vmatpush2.msra.mxu0 0.0
      %843 = vmatprep.mubr.f32.mxu0 0.0
      %844 = vmatmul.mubr.f32.gmra.mxu0 %v777
      %v845 = vpop.f32.mrf.mxu0
      %v846 = vadd.f32 0.0, %v845
      %v847 = vpop.f32.mrf.mxu0
      %848 = vmatprep.mubr.f32.mxu0 0.0
      %849 = vmatmul.mubr.f32.gmra.mxu0 %v778
      %v850 = vpop.f32.mrf.mxu0
      %v851 = vadd.f32 0.0, %v850
      %v852 = vpop.f32.mrf.mxu0
      %853 = vdwg.mxu0
      %854 = vmatprep.subr.mxu0 0.0
      %855 = vmatpush1.msra.mxu0 0.0
      %856 = vmatprep.subr.mxu0 0.0
      %857 = vmatpush1.msra.mxu0 0.0
      %858 = vmatprep.subr.mxu0 0.0
      %859 = vmatpush1.msra.mxu0 0.0
      %860 = vmatprep.subr.mxu0 0.0
      %861 = vmatpush1.msra.mxu0 0.0
      %862 = vmatprep.subr.mxu0 0.0
      %863 = vmatpush1.msra.mxu0 0.0
      %864 = vmatprep.subr.mxu0 0.0
      %865 = vmatpush1.msra.mxu0 0.0
      %866 = vmatprep.subr.mxu0 0.0
      %867 = vmatpush1.msra.mxu0 0.0
      %868 = vmatprep.subr.mxu0 0.0
      %869 = vmatpush1.msra.mxu0 0.0
      %870 = vmatprep.subr.mxu0 0.0
      %871 = vmatpush1.msra.mxu0 0.0
      %872 = vmatprep.subr.mxu0 0.0
      %873 = vmatpush1.msra.mxu0 0.0
      %874 = vmatprep.subr.mxu0 0.0
      %875 = vmatpush1.msra.mxu0 0.0
      %876 = vmatprep.subr.mxu0 0.0
      %877 = vmatpush1.msra.mxu0 0.0
      %878 = vmatprep.subr.mxu0 0.0
      %879 = vmatpush1.msra.mxu0 0.0
      %880 = vmatprep.subr.mxu0 0.0
      %881 = vmatpush1.msra.mxu0 0.0
      %882 = vmatprep.subr.mxu0 0.0
      %883 = vmatpush1.msra.mxu0 %v851
      %884 = vmatprep.subr.mxu0 0.0
      %885 = vmatpush1.msra.mxu0 %v846
      %886 = vmatprep.subr.mxu0 0.0
      %887 = vmatpush2.msra.mxu0 0.0
      %888 = vmatprep.subr.mxu0 0.0
      %889 = vmatpush2.msra.mxu0 0.0
      %890 = vmatprep.subr.mxu0 0.0
      %891 = vmatpush2.msra.mxu0 0.0
      %892 = vmatprep.subr.mxu0 0.0
      %893 = vmatpush2.msra.mxu0 0.0
      %894 = vmatprep.subr.mxu0 0.0
      %895 = vmatpush2.msra.mxu0 0.0
      %896 = vmatprep.subr.mxu0 0.0
      %897 = vmatpush2.msra.mxu0 0.0
      %898 = vmatprep.subr.mxu0 0.0
      %899 = vmatpush2.msra.mxu0 0.0
      %900 = vmatprep.subr.mxu0 0.0
      %901 = vmatpush2.msra.mxu0 0.0
      %902 = vmatprep.subr.mxu0 0.0
      %903 = vmatpush2.msra.mxu0 0.0
      %904 = vmatprep.subr.mxu0 0.0
      %905 = vmatpush2.msra.mxu0 0.0
      %906 = vmatprep.subr.mxu0 0.0
      %907 = vmatpush2.msra.mxu0 0.0
      %908 = vmatprep.subr.mxu0 0.0
      %909 = vmatpush2.msra.mxu0 0.0
      %910 = vmatprep.subr.mxu0 0.0
      %911 = vmatpush2.msra.mxu0 0.0
      %912 = vmatprep.subr.mxu0 0.0
      %913 = vmatpush2.msra.mxu0 0.0
      %914 = vmatprep.subr.mxu0 0.0
      %915 = vmatpush2.msra.mxu0 0.0
      %916 = vmatprep.subr.mxu0 0.0
      %917 = vmatpush2.msra.mxu0 0.0
      %918 = vmatprep.mubr.f32.mxu0 0.0
      %919 = vmatmul.mubr.f32.gmra.mxu0 %v505
      %v920 = vpop.f32.mrf.mxu0
      %v921 = vadd.f32 0.0, %v920
      %v922 = vpop.f32.mrf.mxu0
      %923 = vmatprep.mubr.f32.mxu0 0.0
      %924 = vmatmul.mubr.f32.gmra.mxu0 %v508
      %v925 = vpop.f32.mrf.mxu0
      %v926 = vadd.f32 0.0, %v925
      %v927 = vpop.f32.mrf.mxu0
      %928 = vdwg.mxu0
      %v929 = vmul.f32 %v921, %v921
      %v930 = vmul.f32 %v926, %v926
      %v931 = vadd.f32 %v769, %v929
      %v932 = vadd.f32 %v770, %v930
      %v933 = vadd.f32 %v931, %v932
      %934 = vadd.xlane.f32.xlu0 %v933
      %v935 = vpop.xlane.xlu0 %934
      %v936 = vrot.slane %v935, 4
      %v937 = vadd.f32 %v935, %v936
      %v938 = vrot.slane %v937, 2
      %v939 = vadd.f32 %v937, %v938
      %v940 = vrot.slane %v939, 1
      %v941 = vadd.f32 %v939, %v940
      %s942 = vtos %v941
      %vm943 = vcmp.eq.s32.totalorder %v163, 0
      %vm944 = vcmp.eq.s32.totalorder %v166, 0
      %vm945 = vmand %vm943, %vm944
      %v946 = vstv %s942
      %v947 = vsel %vm945, %v946, 0.0
      %948 = vst [vmem:[%s161] sm:$0xff] %v947
      %p949 = scmp.lt.s32.totalorder %s13, 1
      %s950 = scalar_select %p949, %s13, 1
      %s951 = smul.addr %s950, 8
      %s952 = scalar_lea.vmem %s2, %s951
      // Predicated region
      $region29: #{hsv_channel_loss.1} parent=27 // pred_check
        %p953 = pneg %p83
      $region30: #{hsv_channel_loss.1} parent=27 // pred_check_branch
        %955 = sbr.rel (%p953) target = $region32
      $region31: #{hsv_channel_loss.1} parent=27 // pred_region
        _
      $region32: #{hsv_channel_loss.1} parent=27 // pred_fallthru
        _
    $region28: #{hsv_channel_loss.1} parent=5 // pred_fallthru
      _
    %p956 = scmp.le.s32.totalorder 2, %s8
    // Predicated region
    $region33: #{hsv_channel_loss.1} parent=5 // pred_check
      %p957 = pneg %p956
    $region34: #{hsv_channel_loss.1} parent=5 // pred_check_branch
      %959 = sbr.rel (%p957) target = $region36
    $region35: #{hsv_channel_loss.1} parent=5 // pred_region
      %s960 = ssub.s32 %s8, 2
      // Predicated region
      $region37: #{hsv_channel_loss.1} parent=35 // pred_check
        %p961 = pneg %p89
      $region38: #{hsv_channel_loss.1} parent=35 // pred_check_branch
        %963 = sbr.rel (%p961) target = $region40
      $region39: #{hsv_channel_loss.1} parent=35 // pred_region
        %p964 = scmp.lt.s32.totalorder %s14, 1
        %s965 = scalar_select %p964, %s14, 1
        %s966 = smul.addr %s965, 8
        %s967 = scalar_lea.vmem %s2, %s966
      $region40: #{hsv_channel_loss.1} parent=35 // pred_fallthru
        _
    $region36: #{hsv_channel_loss.1} parent=5 // pred_fallthru
      _
  $region6: #{hsv_channel_loss.1} parent=0 // loop_footer
    %s12 = sadd.s32 1, %s8
  $region7: #{hsv_channel_loss.1} parent=0 // loop_footer_branch
    %7 = sbr.rel target = $region3
  $region8: #{hsv_channel_loss.1} parent=0 // loop_exit
    _

</llo_original>
